<compile_context>
chip_gen: v6e
topology: v6e:2x2x1
jax: 0.10.0
libtpu: 0.0.40
codegen_flags: <defaults>
</compile_context>

<pallas_src>
import functools
import math

import jax
import jax.numpy as jnp
from jax.experimental import pallas as pl
from jax.experimental.pallas import tpu as pltpu


_SQRT_HALF = 0.7071067811865476


def _round_up(x, m):
    return (x + m - 1) // m * m


# --------------------------------------------------------------------- kernel
def _mlp_block_kernel(x_ref, w1_ref, b1_ref, w2_ref, b2_ref, o_ref):
    """One row-tile of: GELU(x @ W1 + b1) @ W2 + b2  (dropout = identity, eval)."""
    x = x_ref[...]                                        # (tm, dim)  f32
    # Linear 1: bf16 MXU inputs, f32 accumulator.
    h = jnp.dot(x.astype(jnp.bfloat16), w1_ref[...],
                preferred_element_type=jnp.float32)       # (tm, hidden)
    h = h + b1_ref[...]
    # Exact (erf-based) GELU in f32 — matches torch.nn.GELU() default.
    h = 0.5 * h * (1.0 + jax.lax.erf(h * _SQRT_HALF))
    # TODO(synk): nn.Dropout(0.1) is identity here (eval); training-mode masking
    #             would use pltpu.prng_seed / pltpu.prng_random_bits.
    # Linear 2: bf16 MXU inputs, f32 accumulator.
    out = jnp.dot(h.astype(jnp.bfloat16), w2_ref[...],
                  preferred_element_type=jnp.float32)     # (tm, dim)
    o_ref[...] = out + b2_ref[...]


# -------------------------------------------------------------------- wrapper
def mlp_block_forward(x, w1, b1, w2, b2):
    """x: (..., dim) f32.
    w1: (hidden, dim), b1: (hidden,), w2: (dim, hidden), b2: (dim,)
    (PyTorch nn.Linear layout: y = x @ W^T + b)."""
    orig_shape = x.shape
    dim = orig_shape[-1]
    hidden = w1.shape[0]

    M = math.prod(orig_shape[:-1]) if len(orig_shape) > 1 else 1
    x2 = x.reshape(M, dim).astype(jnp.float32)

    # Row tile: never pad a small M up to 128 — only to sublane granularity (8).
    tm = min(128, _round_up(M, 8))
    Mp = _round_up(M, tm)
    if Mp != M:
        x2 = jnp.pad(x2, ((0, Mp - M), (0, 0)))

    # Pre-cast weights to bf16 once (halves HBM/VMEM weight traffic); transpose
    # to (in, out) so the kernel does plain row-major x @ W.  Biases stay f32.
    w1t = jnp.transpose(w1).astype(jnp.bfloat16)          # (dim, hidden)
    w2t = jnp.transpose(w2).astype(jnp.bfloat16)          # (hidden, dim)
    b1r = b1.reshape(1, hidden).astype(jnp.float32)
    b2r = b2.reshape(1, dim).astype(jnp.float32)

    out = pl.pallas_call(
        _mlp_block_kernel,
        out_shape=jax.ShapeDtypeStruct((Mp, dim), jnp.float32),
        grid=(Mp // tm,),
        in_specs=[
            pl.BlockSpec((tm, dim), lambda i: (i, 0)),       # x rows (tiled)
            pl.BlockSpec((dim, hidden), lambda i: (0, 0)),   # W1 (resident)
            pl.BlockSpec((1, hidden), lambda i: (0, 0)),     # b1
            pl.BlockSpec((hidden, dim), lambda i: (0, 0)),   # W2 (resident)
            pl.BlockSpec((1, dim), lambda i: (0, 0)),        # b2
        ],
        out_specs=pl.BlockSpec((tm, dim), lambda i: (i, 0)),
        compiler_params=pltpu.CompilerParams(
            dimension_semantics=("parallel",)),
    )(x2, w1t, b1r, w2t, b2r)

    return out[:M].reshape(orig_shape)


# ----------------------------------------------------------------- reference
def mlp_block_reference(x, w1, b1, w2, b2):
    """Pure-JAX reference with the same bf16-input / f32-accumulate recipe."""
    h = jnp.dot(x.astype(jnp.bfloat16), jnp.transpose(w1).astype(jnp.bfloat16),
                preferred_element_type=jnp.float32) + b1.astype(jnp.float32)
    h = 0.5 * h * (1.0 + jax.lax.erf(h * _SQRT_HALF))
    out = jnp.dot(h.astype(jnp.bfloat16), jnp.transpose(w2).astype(jnp.bfloat16),
                  preferred_element_type=jnp.float32) + b2.astype(jnp.float32)
    return out


# ------------------------------------------------------------- parameter init
def _xavier_uniform(key, shape):
    fan_out, fan_in = shape
    bound = math.sqrt(6.0 / (fan_in + fan_out))
    return jax.random.uniform(key, shape, jnp.float32, -bound, bound)


# ----------------------------------------------------------------------- main
if __name__ == "__main__":
    B, seq, dim, hidden_dim = 2, 8, 128, 256

    key = jax.random.PRNGKey(0)
    kx, kw1, kb1, kw2, kb2 = jax.random.split(key, 5)

    x = jax.random.normal(kx, (B, seq, dim), jnp.float32)
    # nn.Linear init per the PyTorch module: xavier_uniform_ weights,
    # normal(std=1e-6) biases.
    w1 = _xavier_uniform(kw1, (hidden_dim, dim))
    b1 = 1e-6 * jax.random.normal(kb1, (hidden_dim,), jnp.float32)
    w2 = _xavier_uniform(kw2, (dim, hidden_dim))
    b2 = 1e-6 * jax.random.normal(kb2, (dim,), jnp.float32)

    fwd = jax.jit(mlp_block_forward)
    out = jax.block_until_ready(fwd(x, w1, b1, w2, b2))
    assert out.shape == (B, seq, dim), out.shape

    ref = mlp_block_reference(x, w1, b1, w2, b2)
    max_err = float(jnp.max(jnp.abs(out - ref)))
    assert jnp.allclose(out, ref, rtol=1e-2, atol=1e-2), max_err

    print("KERNEL_OK")
</pallas_src>

<mosaic_0001>
module attributes {stable_mosaic.version = 11 : i64} {
  func.func @_mlp_block_kernel(%arg0: i32, %arg1: memref<16x128xf32, #tpu.memory_space<vmem>>, %arg2: memref<128x256xbf16, #tpu.memory_space<vmem>>, %arg3: memref<1x256xf32, #tpu.memory_space<vmem>>, %arg4: memref<256x128xbf16, #tpu.memory_space<vmem>>, %arg5: memref<1x128xf32, #tpu.memory_space<vmem>>, %arg6: memref<16x128xf32, #tpu.memory_space<vmem>>) attributes {dimension_semantics = [#tpu.dimension_semantics<parallel>], iteration_bounds = array<i64: 1>, scalar_prefetch = 0 : i64, scratch_operands = 0 : i64, tpu.core_type = #tpu.core_type<tc>, window_params = [{transform_indices = @transform_0, window_bounds = array<i64: 16, 128>}, {pipeline_mode = #tpu.pipeline_mode<synchronous>, transform_indices = @transform_1, window_bounds = array<i64: 128, 256>}, {pipeline_mode = #tpu.pipeline_mode<synchronous>, transform_indices = @transform_2, window_bounds = array<i64: 1, 256>}, {pipeline_mode = #tpu.pipeline_mode<synchronous>, transform_indices = @transform_3, window_bounds = array<i64: 256, 128>}, {pipeline_mode = #tpu.pipeline_mode<synchronous>, transform_indices = @transform_4, window_bounds = array<i64: 1, 128>}, {transform_indices = @transform_5, window_bounds = array<i64: 16, 128>}]} {
    %c0 = arith.constant 0 : index
    %c0_0 = arith.constant 0 : index
    %0 = vector.load %arg1[%c0, %c0_0] : memref<16x128xf32, #tpu.memory_space<vmem>>, vector<16x128xf32>
    %1 = arith.truncf %0 : vector<16x128xf32> to vector<16x128xbf16>
    %c0_1 = arith.constant 0 : index
    %c0_2 = arith.constant 0 : index
    %2 = vector.load %arg2[%c0_1, %c0_2] : memref<128x256xbf16, #tpu.memory_space<vmem>>, vector<128x256xbf16>
    %cst = arith.constant dense<0.000000e+00> : vector<16x256xf32>
    %3 = tpu.matmul %1, %2, %cst {dimension_numbers = #tpu.dot_dimension_numbers<[1], [0], [0], [1], [0, 0, 1, 1], [], []>} : vector<16x128xbf16>, vector<128x256xbf16>, vector<16x256xf32> -> vector<16x256xf32>
    %c0_3 = arith.constant 0 : index
    %c0_4 = arith.constant 0 : index
    %4 = vector.load %arg3[%c0_3, %c0_4] : memref<1x256xf32, #tpu.memory_space<vmem>>, vector<1x256xf32>
    %5 = vector.broadcast %4 : vector<1x256xf32> to vector<16x256xf32>
    %6 = arith.addf %3, %5 : vector<16x256xf32>
    %cst_5 = arith.constant 5.000000e-01 : f32
    %7 = vector.broadcast %cst_5 : f32 to vector<16x256xf32>
    %8 = arith.mulf %7, %6 : vector<16x256xf32>
    %cst_6 = arith.constant 0.707106769 : f32
    %9 = vector.broadcast %cst_6 : f32 to vector<16x256xf32>
    %10 = arith.mulf %6, %9 : vector<16x256xf32>
    %11 = math.erf %10 : vector<16x256xf32>
    %cst_7 = arith.constant 1.000000e+00 : f32
    %12 = vector.broadcast %cst_7 : f32 to vector<16x256xf32>
    %13 = arith.addf %12, %11 : vector<16x256xf32>
    %14 = arith.mulf %8, %13 : vector<16x256xf32>
    %15 = arith.truncf %14 : vector<16x256xf32> to vector<16x256xbf16>
    %c0_8 = arith.constant 0 : index
    %c0_9 = arith.constant 0 : index
    %16 = vector.load %arg4[%c0_8, %c0_9] : memref<256x128xbf16, #tpu.memory_space<vmem>>, vector<256x128xbf16>
    %cst_10 = arith.constant dense<0.000000e+00> : vector<16x128xf32>
    %17 = tpu.matmul %15, %16, %cst_10 {dimension_numbers = #tpu.dot_dimension_numbers<[1], [0], [0], [1], [0, 0, 1, 1], [], []>} : vector<16x256xbf16>, vector<256x128xbf16>, vector<16x128xf32> -> vector<16x128xf32>
    %c0_11 = arith.constant 0 : index
    %c0_12 = arith.constant 0 : index
    %18 = vector.load %arg5[%c0_11, %c0_12] : memref<1x128xf32, #tpu.memory_space<vmem>>, vector<1x128xf32>
    %19 = vector.broadcast %18 : vector<1x128xf32> to vector<16x128xf32>
    %20 = arith.addf %17, %19 : vector<16x128xf32>
    %c0_13 = arith.constant 0 : index
    %c0_14 = arith.constant 0 : index
    %21 = vector.load %arg6[%c0_13, %c0_14] : memref<16x128xf32, #tpu.memory_space<vmem>>, vector<16x128xf32>
    tpu.vector_store %arg6[%c0_13, %c0_14], %20 {strides = array<i32>} : memref<16x128xf32, #tpu.memory_space<vmem>>, vector<16x128xf32>,
    return
  }
  func.func @transform_0(%arg0: i32) -> (i32, i32) {
    %c0_i32 = arith.constant 0 : i32
    %c0_i32_0 = arith.constant 0 : i32
    return %arg0, %c0_i32 : i32, i32
  }
  func.func @transform_1(%arg0: i32) -> (i32, i32) {
    %c0_i32 = arith.constant 0 : i32
    %c0_i32_0 = arith.constant 0 : i32
    %c0_i32_1 = arith.constant 0 : i32
    return %c0_i32, %c0_i32_0 : i32, i32
  }
  func.func @transform_2(%arg0: i32) -> (i32, i32) {
    %c0_i32 = arith.constant 0 : i32
    %c0_i32_0 = arith.constant 0 : i32
    %c0_i32_1 = arith.constant 0 : i32
    return %c0_i32, %c0_i32_0 : i32, i32
  }
  func.func @transform_3(%arg0: i32) -> (i32, i32) {
    %c0_i32 = arith.constant 0 : i32
    %c0_i32_0 = arith.constant 0 : i32
    %c0_i32_1 = arith.constant 0 : i32
    return %c0_i32, %c0_i32_0 : i32, i32
  }
  func.func @transform_4(%arg0: i32) -> (i32, i32) {
    %c0_i32 = arith.constant 0 : i32
    %c0_i32_0 = arith.constant 0 : i32
    %c0_i32_1 = arith.constant 0 : i32
    return %c0_i32, %c0_i32_0 : i32, i32
  }
  func.func @transform_5(%arg0: i32) -> (i32, i32) {
    %c0_i32 = arith.constant 0 : i32
    %c0_i32_0 = arith.constant 0 : i32
    return %arg0, %c0_i32 : i32, i32
  }
}

</mosaic_0001>

<llo_original>
// kernel: mlp_block_forward.1
$region0: #{mlp_block_forward.1}
  #allocation0 [shape = 'u32[]', space=smem, size = 0x4, offset = 0x4, fixed_abs, tag = 'smem constant byte address 0x4 - core index']
  #allocation1 [shape = 'u32[144,128]{1,0:T(1,128)}', space=vmem, size = 0x12000, scoped, tag = 'internal scratch']
  %s0 = inlined_call_operand.vmem [shape: f32[16,128], index: 0, kind: input, shape index: {}]
  %s1 = inlined_call_operand.vmem [shape: bf16[128,256], index: 1, kind: input, shape index: {}]
  %s2 = inlined_call_operand.vmem [shape: f32[1,256], index: 2, kind: input, shape index: {}]
  %s3 = inlined_call_operand.vmem [shape: bf16[256,128], index: 3, kind: input, shape index: {}]
  %s4 = inlined_call_operand.vmem [shape: f32[1,128], index: 4, kind: input, shape index: {}]
  %s5 = inlined_call_operand.hbm [shape: f32[16,128], index: 5, kind: output, shape index: {}]
  %s6 = sld [smem:[#allocation0]]
  $region30: #{mlp_block_forward.1} parent=0
    _
  %s8 = ssub.s32 1, %s6
  %s9 = scalar_select 0, %s8, %s6
  $region1: #{mlp_block_forward.1} parent=0
    #allocation2 [shape = 'u8[8192]{0}', space=vmem, size = 0x2000, scoped, tag = 'output window, operand 0, single buffered']
    #allocation3 [shape = 's32[1]{0}', space=sflag, size = 0x4, scoped, tag = 'scoped memory for mlp_block_forward.1']
    %10 = vsyncpa [#allocation3], 0
    // Predicated region
    $region2: #{mlp_block_forward.1} parent=1 // pred_check
      _
    $region3: #{mlp_block_forward.1} parent=1 // pred_check_branch
      %12 = sbr.rel (0) target = $region5
    $region4: #{mlp_block_forward.1} parent=1 // pred_region
      _
    $region5: #{mlp_block_forward.1} parent=1 // pred_fallthru
      _
    // Predicated region
    $region6: #{mlp_block_forward.1} parent=1 // pred_check
      _
    $region7: #{mlp_block_forward.1} parent=1 // pred_check_branch
      %14 = sbr.rel (0) target = $region9
    $region8: #{mlp_block_forward.1} parent=1 // pred_region
      _
    $region9: #{mlp_block_forward.1} parent=1 // pred_fallthru
      _
    // Predicated region
    $region10: #{mlp_block_forward.1} parent=1 // pred_check
      _
    $region11: #{mlp_block_forward.1} parent=1 // pred_check_branch
      %16 = sbr.rel (0) target = $region13
    $region12: #{mlp_block_forward.1} parent=1 // pred_region
      _
    $region13: #{mlp_block_forward.1} parent=1 // pred_fallthru
      _
    // Predicated region
    $region14: #{mlp_block_forward.1} parent=1 // pred_check
      _
    $region15: #{mlp_block_forward.1} parent=1 // pred_check_branch
      %18 = sbr.rel (0) target = $region17
    $region16: #{mlp_block_forward.1} parent=1 // pred_region
      _
    $region17: #{mlp_block_forward.1} parent=1 // pred_fallthru
      _
    // Predicated region
    $region18: #{mlp_block_forward.1} parent=1 // pred_check
      _
    $region19: #{mlp_block_forward.1} parent=1 // pred_check_branch
      %20 = sbr.rel (0) target = $region21
    $region20: #{mlp_block_forward.1} parent=1 // pred_region
      _
    $region21: #{mlp_block_forward.1} parent=1 // pred_fallthru
      _
    %v22 = vld [vmem:[%s0] sm:$0xff]
    %v23 = vld [vmem:[%s0 + $0x8] sm:$0xff]
    %v24 = vpack.c.bf16 %v23, %v22
    %v25 = vld [vmem:[%s1] sm:$0xff]
    %v26 = vld [vmem:[%s1 + $0x8] sm:$0xff]
    %v27 = vld [vmem:[%s1 + $0x10] sm:$0xff]
    %v28 = vld [vmem:[%s1 + $0x18] sm:$0xff]
    %v29 = vld [vmem:[%s1 + $0x20] sm:$0xff]
    %v30 = vld [vmem:[%s1 + $0x28] sm:$0xff]
    %v31 = vld [vmem:[%s1 + $0x30] sm:$0xff]
    %v32 = vld [vmem:[%s1 + $0x38] sm:$0xff]
    %v33 = vld [vmem:[%s1 + $0x40] sm:$0xff]
    %v34 = vld [vmem:[%s1 + $0x48] sm:$0xff]
    %v35 = vld [vmem:[%s1 + $0x50] sm:$0xff]
    %v36 = vld [vmem:[%s1 + $0x58] sm:$0xff]
    %v37 = vld [vmem:[%s1 + $0x60] sm:$0xff]
    %v38 = vld [vmem:[%s1 + $0x68] sm:$0xff]
    %v39 = vld [vmem:[%s1 + $0x70] sm:$0xff]
    %v40 = vld [vmem:[%s1 + $0x78] sm:$0xff]
    %v41 = vld [vmem:[%s2] sm:$0x3]
    %v43 = vlaneseq
    %v44 = vshrl.u32 %v43, 7
    %v45 = vsub.s32 0, %v44
    %v46 = vrot.slane %v41, %v45
    %v47 = vlaneseq
    %v48 = vshrl.u32 %v47, 7
    %v49 = vsub.s32 1, %v48
    %v50 = vrot.slane %v41, %v49
    %v69 = vunpack.c.l.b16 %v25
    %v70 = vunpack.c.h.b16 %v25
    %v71 = vunpack.c.l.b16 %v26
    %v72 = vunpack.c.h.b16 %v26
    %v73 = vunpack.c.l.b16 %v27
    %v74 = vunpack.c.h.b16 %v27
    %v75 = vunpack.c.l.b16 %v28
    %v76 = vunpack.c.h.b16 %v28
    %v77 = vunpack.c.l.b16 %v29
    %v78 = vunpack.c.h.b16 %v29
    %v79 = vunpack.c.l.b16 %v30
    %v80 = vunpack.c.h.b16 %v30
    %v81 = vunpack.c.l.b16 %v31
    %v82 = vunpack.c.h.b16 %v31
    %v83 = vunpack.c.l.b16 %v32
    %v84 = vunpack.c.h.b16 %v32
    %v85 = vunpack.c.l.b16 %v33
    %v86 = vunpack.c.h.b16 %v33
    %v87 = vunpack.c.l.b16 %v34
    %v88 = vunpack.c.h.b16 %v34
    %v89 = vunpack.c.l.b16 %v35
    %v90 = vunpack.c.h.b16 %v35
    %v91 = vunpack.c.l.b16 %v36
    %v92 = vunpack.c.h.b16 %v36
    %v93 = vunpack.c.l.b16 %v37
    %v94 = vunpack.c.h.b16 %v37
    %v95 = vunpack.c.l.b16 %v38
    %v96 = vunpack.c.h.b16 %v38
    %v97 = vunpack.c.l.b16 %v39
    %v98 = vunpack.c.h.b16 %v39
    %v99 = vunpack.c.l.b16 %v40
    %v100 = vunpack.c.h.b16 %v40
    %v101 = vpack.c.b16 %v71, %v69
    %v102 = vpack.c.b16 %v72, %v70
    %v103 = vpack.c.b16 %v75, %v73
    %v104 = vpack.c.b16 %v76, %v74
    %v105 = vpack.c.b16 %v79, %v77
    %v106 = vpack.c.b16 %v80, %v78
    %v107 = vpack.c.b16 %v83, %v81
    %v108 = vpack.c.b16 %v84, %v82
    %v109 = vpack.c.b16 %v87, %v85
    %v110 = vpack.c.b16 %v88, %v86
    %v111 = vpack.c.b16 %v91, %v89
    %v112 = vpack.c.b16 %v92, %v90
    %v113 = vpack.c.b16 %v95, %v93
    %v114 = vpack.c.b16 %v96, %v94
    %v115 = vpack.c.b16 %v99, %v97
    %v116 = vpack.c.b16 %v100, %v98
    %133 = vmatprep.subr.bf16.mxu0 %v116
    %134 = vmatpush1.bf16.msra.mxu0 %v115
    %135 = vmatprep.subr.bf16.mxu0 %v114
    %136 = vmatpush1.bf16.msra.mxu0 %v113
    %137 = vmatprep.subr.bf16.mxu0 %v112
    %138 = vmatpush1.bf16.msra.mxu0 %v111
    %139 = vmatprep.subr.bf16.mxu0 %v110
    %140 = vmatpush1.bf16.msra.mxu0 %v109
    %141 = vmatprep.subr.bf16.mxu0 %v108
    %142 = vmatpush1.bf16.msra.mxu0 %v107
    %143 = vmatprep.subr.bf16.mxu0 %v106
    %144 = vmatpush1.bf16.msra.mxu0 %v105
    %145 = vmatprep.subr.bf16.mxu0 %v104
    %146 = vmatpush1.bf16.msra.mxu0 %v103
    %147 = vmatprep.subr.bf16.mxu0 %v102
    %148 = vmatpush1.bf16.msra.mxu0 %v101
    %149 = vmatprep.subr.bf16.mxu0 0
    %150 = vmatpush2.bf16.msra.mxu0 0
    %151 = vmatprep.subr.bf16.mxu0 0
    %152 = vmatpush2.bf16.msra.mxu0 0
    %153 = vmatprep.subr.bf16.mxu0 0
    %154 = vmatpush2.bf16.msra.mxu0 0
    %155 = vmatprep.subr.bf16.mxu0 0
    %156 = vmatpush2.bf16.msra.mxu0 0
    %157 = vmatprep.subr.bf16.mxu0 0
    %158 = vmatpush2.bf16.msra.mxu0 0
    %159 = vmatprep.subr.bf16.mxu0 0
    %160 = vmatpush2.bf16.msra.mxu0 0
    %161 = vmatprep.subr.bf16.mxu0 0
    %162 = vmatpush2.bf16.msra.mxu0 0
    %163 = vmatprep.subr.bf16.mxu0 0
    %164 = vmatpush2.bf16.msra.mxu0 0
    %165 = vmatprep.mubr.bf16.mxu0 0
    %166 = vmatmul.mubr.bf16.gmra.mxu0 %v24
    %v167 = vpop.f32.mrf.mxu0
    %v168 = vadd.f32 %v46, %v167
    %v169 = vpop.f32.mrf.mxu0
    %v170 = vadd.f32 %v50, %v169
    %v171 = vpop.f32.mrf.mxu0
    %v172 = vadd.f32 %v46, %v171
    %v173 = vpop.f32.mrf.mxu0
    %v174 = vadd.f32 %v50, %v173
    %175 = vdwg.mxu0
    %v176 = vmul.f32 %v168, 0.5
    %v177 = vmul.f32 %v170, 0.5
    %v178 = vmul.f32 %v172, 0.5
    %v179 = vmul.f32 %v174, 0.5
    %v180 = vmul.f32 %v168, 0.70710677
    %v181 = vmul.f32 %v170, 0.70710677
    %v182 = vmul.f32 %v172, 0.70710677
    %v183 = vmul.f32 %v174, 0.70710677
    %v184 = verf.f32.pop %v180
    %v185 = verf.f32.pop %v181
    %v186 = verf.f32.pop %v182
    %v187 = verf.f32.pop %v183
    %v188 = vadd.f32 %v184, 1.0
    %v189 = vadd.f32 %v185, 1.0
    %v190 = vadd.f32 %v186, 1.0
    %v191 = vadd.f32 %v187, 1.0
    %v192 = vmul.f32 %v176, %v188
    %v193 = vmul.f32 %v177, %v189
    %v194 = vmul.f32 %v178, %v190
    %v195 = vmul.f32 %v179, %v191
    %v196 = vpack.c.bf16 %v194, %v192
    %v197 = vpack.c.bf16 %v195, %v193
    %v198 = vld [vmem:[%s3] sm:$0xf]
    %v199 = vld [vmem:[%s3 + $0x4] sm:$0xf]
    %v200 = vld [vmem:[%s3 + $0x8] sm:$0xf]
    %v201 = vld [vmem:[%s3 + $0xc] sm:$0xf]
    %v202 = vld [vmem:[%s3 + $0x10] sm:$0xf]
    %v203 = vld [vmem:[%s3 + $0x14] sm:$0xf]
    %v204 = vld [vmem:[%s3 + $0x18] sm:$0xf]
    %v205 = vld [vmem:[%s3 + $0x1c] sm:$0xf]
    %v206 = vld [vmem:[%s3 + $0x20] sm:$0xf]
    %v207 = vld [vmem:[%s3 + $0x24] sm:$0xf]
    %v208 = vld [vmem:[%s3 + $0x28] sm:$0xf]
    %v209 = vld [vmem:[%s3 + $0x2c] sm:$0xf]
    %v210 = vld [vmem:[%s3 + $0x30] sm:$0xf]
    %v211 = vld [vmem:[%s3 + $0x34] sm:$0xf]
    %v212 = vld [vmem:[%s3 + $0x38] sm:$0xf]
    %v213 = vld [vmem:[%s3 + $0x3c] sm:$0xf]
    %v214 = vld [vmem:[%s3 + $0x40] sm:$0xf]
    %v215 = vld [vmem:[%s3 + $0x44] sm:$0xf]
    %v216 = vld [vmem:[%s3 + $0x48] sm:$0xf]
    %v217 = vld [vmem:[%s3 + $0x4c] sm:$0xf]
    %v218 = vld [vmem:[%s3 + $0x50] sm:$0xf]
    %v219 = vld [vmem:[%s3 + $0x54] sm:$0xf]
    %v220 = vld [vmem:[%s3 + $0x58] sm:$0xf]
    %v221 = vld [vmem:[%s3 + $0x5c] sm:$0xf]
    %v222 = vld [vmem:[%s3 + $0x60] sm:$0xf]
    %v223 = vld [vmem:[%s3 + $0x64] sm:$0xf]
    %v224 = vld [vmem:[%s3 + $0x68] sm:$0xf]
    %v225 = vld [vmem:[%s3 + $0x6c] sm:$0xf]
    %v226 = vld [vmem:[%s3 + $0x70] sm:$0xf]
    %v227 = vld [vmem:[%s3 + $0x74] sm:$0xf]
    %v228 = vld [vmem:[%s3 + $0x78] sm:$0xf]
    %v229 = vld [vmem:[%s3 + $0x7c] sm:$0xf]
    %v230 = vld [vmem:[%s4] sm:$0x1]
    %v232 = vlaneseq
    %v233 = vshrl.u32 %v232, 7
    %v234 = vsub.s32 0, %v233
    %v235 = vrot.slane %v230, %v234
    %v269 = vunpack.c.l.b16 %v198
    %v270 = vunpack.c.l.b16 %v199
    %v271 = vunpack.c.l.b16 %v200
    %v272 = vunpack.c.l.b16 %v201
    %v273 = vunpack.c.l.b16 %v202
    %v274 = vunpack.c.l.b16 %v203
    %v275 = vunpack.c.l.b16 %v204
    %v276 = vunpack.c.l.b16 %v205
    %v277 = vunpack.c.l.b16 %v206
    %v278 = vunpack.c.l.b16 %v207
    %v279 = vunpack.c.l.b16 %v208
    %v280 = vunpack.c.l.b16 %v209
    %v281 = vunpack.c.l.b16 %v210
    %v282 = vunpack.c.l.b16 %v211
    %v283 = vunpack.c.l.b16 %v212
    %v284 = vunpack.c.l.b16 %v213
    %v285 = vunpack.c.l.b16 %v214
    %v286 = vunpack.c.l.b16 %v215
    %v287 = vunpack.c.l.b16 %v216
    %v288 = vunpack.c.l.b16 %v217
    %v289 = vunpack.c.l.b16 %v218
    %v290 = vunpack.c.l.b16 %v219
    %v291 = vunpack.c.l.b16 %v220
    %v292 = vunpack.c.l.b16 %v221
    %v293 = vunpack.c.l.b16 %v222
    %v294 = vunpack.c.l.b16 %v223
    %v295 = vunpack.c.l.b16 %v224
    %v296 = vunpack.c.l.b16 %v225
    %v297 = vunpack.c.l.b16 %v226
    %v298 = vunpack.c.l.b16 %v227
    %v299 = vunpack.c.l.b16 %v228
    %v300 = vunpack.c.l.b16 %v229
    %v301 = vpack.c.b16 %v270, %v269
    %v302 = vpack.c.b16 %v272, %v271
    %v303 = vpack.c.b16 %v274, %v273
    %v304 = vpack.c.b16 %v276, %v275
    %v305 = vpack.c.b16 %v278, %v277
    %v306 = vpack.c.b16 %v280, %v279
    %v307 = vpack.c.b16 %v282, %v281
    %v308 = vpack.c.b16 %v284, %v283
    %v309 = vpack.c.b16 %v286, %v285
    %v310 = vpack.c.b16 %v288, %v287
    %v311 = vpack.c.b16 %v290, %v289
    %v312 = vpack.c.b16 %v292, %v291
    %v313 = vpack.c.b16 %v294, %v293
    %v314 = vpack.c.b16 %v296, %v295
    %v315 = vpack.c.b16 %v298, %v297
    %v316 = vpack.c.b16 %v300, %v299
    %333 = vmatprep.subr.bf16.mxu0 0
    %334 = vmatpush1.bf16.msra.mxu0 %v308
    %335 = vmatprep.subr.bf16.mxu0 0
    %336 = vmatpush1.bf16.msra.mxu0 %v307
    %337 = vmatprep.subr.bf16.mxu0 0
    %338 = vmatpush1.bf16.msra.mxu0 %v306
    %339 = vmatprep.subr.bf16.mxu0 0
    %340 = vmatpush1.bf16.msra.mxu0 %v305
    %341 = vmatprep.subr.bf16.mxu0 0
    %342 = vmatpush1.bf16.msra.mxu0 %v304
    %343 = vmatprep.subr.bf16.mxu0 0
    %344 = vmatpush1.bf16.msra.mxu0 %v303
    %345 = vmatprep.subr.bf16.mxu0 0
    %346 = vmatpush1.bf16.msra.mxu0 %v302
    %347 = vmatprep.subr.bf16.mxu0 0
    %348 = vmatpush1.bf16.msra.mxu0 %v301
    %349 = vmatprep.subr.bf16.mxu0 0
    %350 = vmatpush2.bf16.msra.mxu0 %v316
    %351 = vmatprep.subr.bf16.mxu0 0
    %352 = vmatpush2.bf16.msra.mxu0 %v315
    %353 = vmatprep.subr.bf16.mxu0 0
    %354 = vmatpush2.bf16.msra.mxu0 %v314
    %355 = vmatprep.subr.bf16.mxu0 0
    %356 = vmatpush2.bf16.msra.mxu0 %v313
    %357 = vmatprep.subr.bf16.mxu0 0
    %358 = vmatpush2.bf16.msra.mxu0 %v312
    %359 = vmatprep.subr.bf16.mxu0 0
    %360 = vmatpush2.bf16.msra.mxu0 %v311
    %361 = vmatprep.subr.bf16.mxu0 0
    %362 = vmatpush2.bf16.msra.mxu0 %v310
    %363 = vmatprep.subr.bf16.mxu0 0
    %364 = vmatpush2.bf16.msra.mxu0 %v309
    %365 = vmatprep.mubr.bf16.mxu0 %v197
    %366 = vmatmul.mubr.bf16.gmra.mxu0 %v196
    %v367 = vpop.f32.mrf.mxu0
    %v368 = vadd.f32 %v235, %v367
    %v369 = vpop.f32.mrf.mxu0
    %v370 = vpop.f32.mrf.mxu0
    %v371 = vadd.f32 %v235, %v370
    %v372 = vpop.f32.mrf.mxu0
    %373 = vdwg.mxu0
    %374 = vst [vmem:[#allocation2] sm:$0xff] %v368
    %375 = vst [vmem:[#allocation2 + $0x8] sm:$0xff] %v371
    // Predicated region
    $region22: #{mlp_block_forward.1} parent=1 // pred_check
      _
    $region23: #{mlp_block_forward.1} parent=1 // pred_check_branch
      %377 = sbr.rel (0) target = $region25
    $region24: #{mlp_block_forward.1} parent=1 // pred_region
      %s379 = ssub.s32 256, 256
      %380 = vsyncadd [#allocation3], %s379
      %s381 = sshll.u32 [#allocation2], 4
      %s382 = int_to_ptr.vmem [resolvable:$true] %s381
      %387 = dma.vmem_to_hbm [thread:$0]  %s382, 256, %s5, [#allocation3], 128, 128, 8
    $region25: #{mlp_block_forward.1} parent=1 // pred_fallthru
      _
    // Predicated region
    $region26: #{mlp_block_forward.1} parent=1 // pred_check
      _
    $region27: #{mlp_block_forward.1} parent=1 // pred_check_branch
      %389 = sbr.rel (0) target = $region29
    $region28: #{mlp_block_forward.1} parent=1 // pred_region
      %390 = dma.done [#allocation3], 256
    $region29: #{mlp_block_forward.1} parent=1 // pred_fallthru
      _
    %391 = vsyncpa [#allocation3], 1

</llo_original>
